<compile_context>
chip_gen: v7x
topology: tpu7x:2x2x1
jax: 0.10.0
libtpu: 0.0.40
codegen_flags: <defaults>
</compile_context>

<pallas_src>
import functools

import jax
import jax.numpy as jnp
from jax import lax
from jax.experimental import pallas as pl
from jax.experimental.pallas import tpu as pltpu


def _round_up(x: int, m: int) -> int:
    return (x + m - 1) // m * m


def _cdiv(a: int, b: int) -> int:
    return (a + b - 1) // b


def _vmem_limit_bytes() -> int:
    """~75% of physical VMEM (leaves Mosaic scratch / semaphore headroom, esp. on v7x)."""
    try:
        phys = pltpu.get_tpu_info().vmem_capacity_bytes
    except Exception:  # conservative fallback (v7x per-core size)
        phys = 64 * 1024 * 1024
    return min((phys * 3) // 4, 96 * 1024 * 1024)


# Per-grid-step VMEM budget used to size the spatial row block (input/output double buffers
# and in-kernel temporaries all scale with rows-per-block; weights are a small fixed cost).
_ROW_BLOCK_BUDGET = 20 * 1024 * 1024


def _pick_row_block(H: int, row_bytes: int, row_block=None):
    if row_block is None:
        th = max(1, min(H, _ROW_BLOCK_BUDGET // max(row_bytes, 1)))
    else:
        th = max(1, min(H, int(row_block)))
    n_hb = _cdiv(H, th)
    th = _cdiv(H, n_hb)          # even blocks -> minimal padded rows
    return th, n_hb


def _conv_bn_relu_kernel(x_ref, w_ref, scale_ref, shift_ref, o_ref, *, TH, Wc, KH):
    # x_ref:  (1, TH+KH-1, Wc, tcin) bf16 - one column-pre-shifted, row-haloed input block
    # w_ref:  (1, KH, tcin, tcout)   bf16 - taps for this (kw, ci, co) block
    # scale_ref / shift_ref: (1, tcout) f32 - folded BatchNorm (eval)
    # o_ref:  (1, TH, Wc, tcout)     f32 - resident accumulator across the (ci, kw) axes
    ci, kw = pl.program_id(3), pl.program_id(4)

    @pl.when(jnp.logical_and(ci == 0, kw == 0))
    def _init():
        o_ref[...] = jnp.zeros_like(o_ref)

    hx = TH + KH - 1
    thw = TH * Wc
    tcin = x_ref.shape[-1]
    tcout = o_ref.shape[-1]

    # Wc % 8 == 0 -> merging (1, Hx, Wc) into sublanes is a free relayout, and every
    # per-kh row window below is a sublane-aligned (free) slice of the flat slab.
    flat = x_ref[...].reshape(hx * Wc, tcin)
    for kh in range(KH):                                  # static taps
        patch = flat[kh * Wc: kh * Wc + thw]              # aligned row window
        o_ref[...] += jnp.dot(
            patch, w_ref[0, kh], preferred_element_type=jnp.float32
        ).reshape(1, TH, Wc, tcout)

    @pl.when(jnp.logical_and(ci == pl.num_programs(3) - 1,
                             kw == pl.num_programs(4) - 1))
    def _finalize():
        y = o_ref[...] * scale_ref[...] + shift_ref[...]
        o_ref[...] = jnp.maximum(y, 0.0)


def _im2col_bn_relu_kernel(x_ref, w_ref, scale_ref, shift_ref, o_ref, *, TH, Wc):
    # Small-Cin fast path: all taps folded into the contraction dim -> one matmul per block.
    # x_ref: (1, TH, Wc, K) bf16 im2col patches; w_ref: (K, tcout) bf16.
    k = x_ref.shape[-1]
    tcout = o_ref.shape[-1]
    patch = x_ref[...].reshape(TH * Wc, k)                # free: Wc % 8 == 0
    y = jnp.dot(patch, w_ref[...], preferred_element_type=jnp.float32)
    y = y * scale_ref[...] + shift_ref[...]
    o_ref[...] = jnp.maximum(y, 0.0).reshape(1, TH, Wc, tcout)


def conv_norm_act_aa(x_nchw, weight_oihw, gamma, beta, running_mean, running_var,
                     *, eps=1e-5, use_im2col=None, row_block=None):
    """Forward of ConvNormActAa: 'same' conv (stride 1, no bias) -> BN(eval)+ReLU -> Identity."""
    N, C_in, H, W = map(int, x_nchw.shape)
    C_out, _, KH, KW = map(int, weight_oihw.shape)
    pad_h, pad_w = (KH - 1) // 2, (KW - 1) // 2

    tcout = 128                                   # safe MXU N block on all chip generations
    tcin = 256 if C_in % 256 == 0 else 128
    cout_p = _round_up(C_out, tcout)
    cin_p = _round_up(C_in, tcin)
    n_co = cout_p // tcout
    n_ci = cin_p // tcin
    Wc = _round_up(W, 8)                          # sublane-aligned compute width

    if use_im2col is None:
        use_im2col = (KH * KW * C_in) <= 256

    # Fold BatchNorm (eval / running stats) into a single (scale, shift) pair.
    scale = (gamma * lax.rsqrt(running_var + eps)).astype(jnp.float32)
    shift = (beta - running_mean * scale).astype(jnp.float32)
    scale = jnp.pad(scale, (0, cout_p - C_out)).reshape(1, cout_p)
    shift = jnp.pad(shift, (0, cout_p - C_out)).reshape(1, cout_p)

    x_nhwc = jnp.transpose(x_nchw, (0, 2, 3, 1))
    w_hwio = jnp.transpose(weight_oihw, (2, 3, 1, 0))
    vmem_limit = _vmem_limit_bytes()

    if use_im2col:
        K = KH * KW * C_in
        row_bytes = 3 * Wc * K * 2 + 3 * Wc * tcout * 4
        TH, n_hb = _pick_row_block(H, row_bytes, row_block)
        H_pad = TH * n_hb

        x_sp = jnp.pad(
            x_nhwc,
            ((0, 0), (pad_h, pad_h + H_pad - H), (pad_w, pad_w + Wc - W), (0, 0)),
        ).astype(jnp.bfloat16)
        cols = [x_sp[:, kh:kh + H_pad, kw:kw + Wc, :]
                for kh in range(KH) for kw in range(KW)]
        x_im2col = jnp.concatenate(cols, axis=-1)         # (N, H_pad, Wc, K)
        w_flat = jnp.pad(w_hwio.reshape(K, C_out),
                         ((0, 0), (0, cout_p - C_out))).astype(jnp.bfloat16)

        cost = pl.CostEstimate(
            flops=2 * N * H_pad * Wc * K * cout_p,
            transcendentals=0,
            bytes_accessed=int(x_im2col.size) * 2 + int(w_flat.size) * 2
            + N * H_pad * Wc * cout_p * 4)

        out = pl.pallas_call(
            functools.partial(_im2col_bn_relu_kernel, TH=TH, Wc=Wc),
            out_shape=jax.ShapeDtypeStruct((N, H_pad, Wc, cout_p), jnp.float32),
            grid_spec=pltpu.PrefetchScalarGridSpec(
                num_scalar_prefetch=0,
                grid=(N, n_hb, n_co),
                in_specs=[
                    pl.BlockSpec((1, TH, Wc, K), lambda n, hb, co: (n, hb, 0, 0)),
                    pl.BlockSpec((K, tcout), lambda n, hb, co: (0, co)),
                    pl.BlockSpec((1, tcout), lambda n, hb, co: (0, co)),
                    pl.BlockSpec((1, tcout), lambda n, hb, co: (0, co)),
                ],
                out_specs=pl.BlockSpec((1, TH, Wc, tcout),
                                       lambda n, hb, co: (n, hb, 0, co)),
            ),
            compiler_params=pltpu.CompilerParams(
                dimension_semantics=("parallel", "parallel", "parallel"),
                vmem_limit_bytes=vmem_limit),
            cost_estimate=cost,
        )(x_im2col, w_flat, scale, shift)
    else:
        row_bytes = 3 * Wc * tcin * 2 + 3 * Wc * tcout * 4
        TH, n_hb = _pick_row_block(H, row_bytes, row_block)
        H_pad = TH * n_hb
        Hx = TH + KH - 1

        x_sp = jnp.pad(
            x_nhwc,
            ((0, 0), (pad_h, pad_h + H_pad - H), (pad_w, pad_w + Wc - W),
             (0, cin_p - C_in)),
        ).astype(jnp.bfloat16)
        # Pre-materialize KW column-shifted, row-haloed blocks -> all-Blocked BlockSpecs and
        # zero in-kernel relayouts (3x activation DMA traffic, hidden on a compute-bound conv).
        blocks = []
        for kw in range(KW):
            colw = x_sp[:, :, kw:kw + Wc, :]              # (N, H_pad+KH-1, Wc, cin_p)
            for hb in range(n_hb):
                blocks.append(colw[:, hb * TH: hb * TH + Hx])
        x_blk = jnp.stack(blocks, axis=0).reshape(KW * n_hb * N, Hx, Wc, cin_p)

        # Weights: OIHW -> (KW, KH, Cin, Cout), channel-pad, bf16.
        w_prep = jnp.pad(
            jnp.transpose(weight_oihw, (3, 2, 1, 0)),
            ((0, 0), (0, 0), (0, cin_p - C_in), (0, cout_p - C_out)),
        ).astype(jnp.bfloat16)

        cost = pl.CostEstimate(
            flops=2 * N * H_pad * Wc * KH * KW * cin_p * cout_p,
            transcendentals=0,
            bytes_accessed=int(x_blk.size) * 2 + int(w_prep.size) * 2
            + N * H_pad * Wc * cout_p * 4)

        out = pl.pallas_call(
            functools.partial(_conv_bn_relu_kernel, TH=TH, Wc=Wc, KH=KH),
            out_shape=jax.ShapeDtypeStruct((N, H_pad, Wc, cout_p), jnp.float32),
            grid_spec=pltpu.PrefetchScalarGridSpec(
                num_scalar_prefetch=0,
                grid=(N, n_hb, n_co, n_ci, KW),           # reduction axes (ci, kw) last
                in_specs=[
                    pl.BlockSpec(
                        (1, Hx, Wc, tcin),
                        lambda n, hb, co, ci, kw: ((kw * n_hb + hb) * N + n, 0, 0, ci)),
                    pl.BlockSpec(
                        (1, KH, tcin, tcout),
                        lambda n, hb, co, ci, kw: (kw, 0, ci, co)),
                    pl.BlockSpec((1, tcout), lambda n, hb, co, ci, kw: (0, co)),
                    pl.BlockSpec((1, tcout), lambda n, hb, co, ci, kw: (0, co)),
                ],
                out_specs=pl.BlockSpec(
                    (1, TH, Wc, tcout),
                    lambda n, hb, co, ci, kw: (n, hb, 0, co)),
            ),
            compiler_params=pltpu.CompilerParams(
                dimension_semantics=("parallel", "parallel", "parallel",
                                     "arbitrary", "arbitrary"),
                vmem_limit_bytes=vmem_limit),
            cost_estimate=cost,
        )(x_blk, w_prep, scale, shift)

    # Back to the PyTorch module's NCHW float32 convention.
    out = out[:, :H, :W, :C_out]
    return jnp.transpose(out, (0, 3, 1, 2))


def _reference(x_nchw, weight_oihw, gamma, beta, mean, var, eps=1e-5):
    kh = weight_oihw.shape[2]
    pad = (kh - 1) // 2
    y = lax.conv_general_dilated(
        x_nchw, weight_oihw, window_strides=(1, 1),
        padding=[(pad, pad), (pad, pad)],
        dimension_numbers=("NCHW", "OIHW", "NCHW"),
        precision=lax.Precision.HIGHEST)
    s = (gamma * lax.rsqrt(var + eps)).reshape(1, -1, 1, 1)
    b = (beta - mean * gamma * lax.rsqrt(var + eps)).reshape(1, -1, 1, 1)
    return jnp.maximum(y * s + b, 0.0)


if __name__ == "__main__":
    key = jax.random.PRNGKey(0)

    def make_inputs(k, N, C_in, H, W, C_out, KH=3, KW=3):
        ks = jax.random.split(k, 6)
        x = jax.random.normal(ks[0], (N, C_in, H, W), dtype=jnp.float32)
        w = jax.random.normal(ks[1], (C_out, C_in, KH, KW), dtype=jnp.float32) * 0.1
        gamma = 1.0 + 0.1 * jax.random.normal(ks[2], (C_out,), dtype=jnp.float32)
        beta = 0.1 * jax.random.normal(ks[3], (C_out,), dtype=jnp.float32)
        mean = 0.1 * jax.random.normal(ks[4], (C_out,), dtype=jnp.float32)
        var = jnp.abs(1.0 + 0.1 * jax.random.normal(ks[5], (C_out,), dtype=jnp.float32))
        return x, w, gamma, beta, mean, var

    cases = [
        # Primary shape (auto -> im2col fast path, K = 36).
        dict(N=2, C_in=4, H=16, W=16, C_out=8, kw=dict()),
        # Same shape forced onto the general path with 2 row blocks (haloed row windows).
        dict(N=2, C_in=4, H=16, W=16, C_out=8, kw=dict(use_im2col=False, row_block=8)),
        # W % 8 != 0 -> exercises the compute-width / row padding path.
        dict(N=1, C_in=8, H=14, W=14, C_out=16, kw=dict(use_im2col=False, row_block=4)),
        # Multiple Cin blocks (n_ci = 3) + row blocks + kw reduction axis all together.
        dict(N=1, C_in=384, H=16, W=16, C_out=128, kw=dict(use_im2col=False, row_block=8)),
    ]

    for i, c in enumerate(cases):
        key, sub = jax.random.split(key)
        x, w, gamma, beta, mean, var = make_inputs(sub, c["N"], c["C_in"], c["H"],
                                                   c["W"], c["C_out"])
        fwd = jax.jit(functools.partial(conv_norm_act_aa, **c["kw"]))
        out = jax.block_until_ready(fwd(x, w, gamma, beta, mean, var))
        assert out.shape == (c["N"], c["C_out"], c["H"], c["W"]), f"case {i}: bad shape"

        # Tight check: reference fed the same bf16-quantized conv operands (isolates
        # structural/indexing errors from the deliberate bf16-on-MXU cast).
        xq = x.astype(jnp.bfloat16).astype(jnp.float32)
        wq = w.astype(jnp.bfloat16).astype(jnp.float32)
        ref_q = _reference(xq, wq, gamma, beta, mean, var)
        assert jnp.allclose(out, ref_q, atol=2e-3, rtol=2e-3), \
            f"case {i}: mismatch vs bf16-quantized reference"

        # Loose check: pure-f32 module semantics (difference = bf16 operand rounding;
        # tolerance scales with fan-in of the convolution).
        fan_in = c["C_in"] * 9
        loose = 4e-2 * max(1.0, (fan_in / 36.0) ** 0.5)
        ref = _reference(x, w, gamma, beta, mean, var)
        assert jnp.allclose(out, ref, atol=loose, rtol=2e-2), \
            f"case {i}: mismatch vs f32 reference"

    print("KERNEL_OK")
</pallas_src>

<mosaic_0001>
module attributes {stable_mosaic.version = 11 : i64} {
  func.func @_im2col_bn_relu_kernel(%arg0: i32, %arg1: i32, %arg2: i32, %arg3: memref<1x16x16x36xbf16, #tpu.memory_space<vmem>>, %arg4: memref<36x128xbf16, #tpu.memory_space<vmem>>, %arg5: memref<1x128xf32, #tpu.memory_space<vmem>>, %arg6: memref<1x128xf32, #tpu.memory_space<vmem>>, %arg7: memref<1x16x16x128xf32, #tpu.memory_space<vmem>>) attributes {dimension_semantics = [#tpu.dimension_semantics<parallel>, #tpu.dimension_semantics<parallel>, #tpu.dimension_semantics<parallel>], iteration_bounds = array<i64: 2, 1, 1>, scalar_prefetch = 0 : i64, scratch_operands = 0 : i64, tpu.core_type = #tpu.core_type<tc>, window_params = [{transform_indices = @transform_0, window_bounds = array<i64: 1, 16, 16, 36>}, {transform_indices = @transform_1, window_bounds = array<i64: 36, 128>}, {transform_indices = @transform_2, window_bounds = array<i64: 1, 128>}, {transform_indices = @transform_3, window_bounds = array<i64: 1, 128>}, {transform_indices = @transform_4, window_bounds = array<i64: 1, 16, 16, 128>}]} {
    %c0 = arith.constant 0 : index
    %c0_0 = arith.constant 0 : index
    %c0_1 = arith.constant 0 : index
    %c0_2 = arith.constant 0 : index
    %0 = vector.load %arg3[%c0, %c0_0, %c0_1, %c0_2] : memref<1x16x16x36xbf16, #tpu.memory_space<vmem>>, vector<1x16x16x36xbf16>
    %1 = vector.shape_cast %0 : vector<1x16x16x36xbf16> to vector<256x36xbf16>
    %c0_3 = arith.constant 0 : index
    %c0_4 = arith.constant 0 : index
    %2 = vector.load %arg4[%c0_3, %c0_4] : memref<36x128xbf16, #tpu.memory_space<vmem>>, vector<36x128xbf16>
    %cst = arith.constant dense<0.000000e+00> : vector<256x128xf32>
    %3 = tpu.matmul %1, %2, %cst {dimension_numbers = #tpu.dot_dimension_numbers<[1], [0], [0], [1], [0, 0, 1, 1], [], []>} : vector<256x36xbf16>, vector<36x128xbf16>, vector<256x128xf32> -> vector<256x128xf32>
    %c0_5 = arith.constant 0 : index
    %c0_6 = arith.constant 0 : index
    %4 = vector.load %arg5[%c0_5, %c0_6] : memref<1x128xf32, #tpu.memory_space<vmem>>, vector<1x128xf32>
    %5 = vector.broadcast %4 : vector<1x128xf32> to vector<256x128xf32>
    %6 = arith.mulf %3, %5 : vector<256x128xf32>
    %c0_7 = arith.constant 0 : index
    %c0_8 = arith.constant 0 : index
    %7 = vector.load %arg6[%c0_7, %c0_8] : memref<1x128xf32, #tpu.memory_space<vmem>>, vector<1x128xf32>
    %8 = vector.broadcast %7 : vector<1x128xf32> to vector<256x128xf32>
    %9 = arith.addf %6, %8 : vector<256x128xf32>
    %cst_9 = arith.constant 0.000000e+00 : f32
    %10 = vector.broadcast %cst_9 : f32 to vector<256x128xf32>
    %11 = arith.maximumf %9, %10 : vector<256x128xf32>
    %12 = vector.shape_cast %11 : vector<256x128xf32> to vector<1x16x16x128xf32>
    %c0_10 = arith.constant 0 : index
    %c0_11 = arith.constant 0 : index
    %c0_12 = arith.constant 0 : index
    %c0_13 = arith.constant 0 : index
    %13 = vector.load %arg7[%c0_10, %c0_11, %c0_12, %c0_13] : memref<1x16x16x128xf32, #tpu.memory_space<vmem>>, vector<1x16x16x128xf32>
    tpu.vector_store %arg7[%c0_10, %c0_11, %c0_12, %c0_13], %12 {strides = array<i32>} : memref<1x16x16x128xf32, #tpu.memory_space<vmem>>, vector<1x16x16x128xf32>,
    return
  }
  func.func @transform_0(%arg0: i32, %arg1: i32, %arg2: i32) -> (i32, i32, i32, i32) {
    %c0_i32 = arith.constant 0 : i32
    %c0_i32_0 = arith.constant 0 : i32
    %c0_i32_1 = arith.constant 0 : i32
    return %arg0, %arg1, %c0_i32, %c0_i32_0 : i32, i32, i32, i32
  }
  func.func @transform_1(%arg0: i32, %arg1: i32, %arg2: i32) -> (i32, i32) {
    %c0_i32 = arith.constant 0 : i32
    %c0_i32_0 = arith.constant 0 : i32
    return %c0_i32, %arg2 : i32, i32
  }
  func.func @transform_2(%arg0: i32, %arg1: i32, %arg2: i32) -> (i32, i32) {
    %c0_i32 = arith.constant 0 : i32
    %c0_i32_0 = arith.constant 0 : i32
    return %c0_i32, %arg2 : i32, i32
  }
  func.func @transform_3(%arg0: i32, %arg1: i32, %arg2: i32) -> (i32, i32) {
    %c0_i32 = arith.constant 0 : i32
    %c0_i32_0 = arith.constant 0 : i32
    return %c0_i32, %arg2 : i32, i32
  }
  func.func @transform_4(%arg0: i32, %arg1: i32, %arg2: i32) -> (i32, i32, i32, i32) {
    %c0_i32 = arith.constant 0 : i32
    %c0_i32_0 = arith.constant 0 : i32
    return %arg0, %arg1, %c0_i32, %arg2 : i32, i32, i32, i32
  }
}

</mosaic_0001>

<llo_original>
// kernel: conv_norm_act_aa.1
$region0: #{conv_norm_act_aa.1}
  #allocation0 [shape = 'u32[]', space=smem, size = 0x4, offset = 0x4, fixed_abs, tag = 'smem constant byte address 0x4 - core index']
  #allocation1 [shape = 'u32[144,128]{1,0:T(1,128)}', space=vmem, size = 0x12000, scoped, tag = 'internal scratch']
  %s0 = inlined_call_operand.vmem [shape: bf16[2,16,16,36], index: 0, kind: input, shape index: {}]
  %s1 = inlined_call_operand.vmem [shape: bf16[36,128], index: 1, kind: input, shape index: {}]
  %s2 = inlined_call_operand.vmem [shape: f32[1,128], index: 2, kind: input, shape index: {}]
  %s3 = inlined_call_operand.vmem [shape: f32[1,128], index: 3, kind: input, shape index: {}]
  %s4 = inlined_call_operand.vmem [shape: f32[2,16,16,128], index: 4, kind: output, shape index: {}]
  %s5 = sld [smem:[#allocation0]]
  $region49: #{conv_norm_act_aa.1} parent=0
    _
  %s7 = ssub.s32 1, %s5
  %s8 = scalar_select 0, %s7, %s5
  loop: start=0, step=1, limit=4
  $region2: #{conv_norm_act_aa.1} parent=0 // loop_pre_header
    _
  $region3: #{conv_norm_act_aa.1} parent=0 // loop_header
    %s10 = sphi 0, %s14
    %p11 = scmp.ge.s32.totalorder %s10, 4
    %s17 = sphi 0, %s36
    %s18 = sphi 0, %s32
    %s19 = sphi 0, %s28
    %s20 = sphi 0, %s17
    %s21 = sphi 0, %s18
    %s22 = sphi 0, %s19
    %s23 = sphi 0, %s20
    %s24 = sphi 0, %s21
    %s25 = sphi 0, %s22
    %s41 = sphi 0, %s43
    %s44 = sphi 0, %s41
    %s45 = sphi 0, %s44
    %s61 = sphi 0, %s45
    %s67 = sphi 0, %s69
    %s70 = sphi 0, %s67
    %s71 = sphi 0, %s70
    %s87 = sphi 0, %s71
    %s93 = sphi 0, %s95
    %s96 = sphi 0, %s93
    %s97 = sphi 0, %s96
    %s113 = sphi 0, %s97
    %s119 = sphi 0, %s121
    %s122 = sphi 0, %s119
    %s123 = sphi 0, %s122
    %s139 = sphi 0, %s123
    %s149 = sphi 0, %s151
    %s152 = sphi 0, %s149
    %s153 = sphi 0, %s152
    %s169 = sphi 0, %s153
  $region4: #{conv_norm_act_aa.1} parent=0 // loop_header_branch
    %13 = sbr.rel (%p11) target = $region8
  $region5: #{conv_norm_act_aa.1} parent=0 // loop_body
    %s15 = ssub.s32 %s10, 1
    %s16 = ssub.s32 %s10, 2
    %s26 = sadd.s32 1, %s19
    %p27 = scmp.ge.s32.totalorder %s26, 1
    %s28 = scalar_select %p27, 0, %s26
    %s29 = sadd.s32 1, %s18
    %s30 = scalar_select %p27, %s29, %s18
    %p31 = scmp.ge.s32.totalorder %s30, 1
    %s32 = scalar_select %p31, 0, %s30
    %s33 = sadd.s32 1, %s17
    %s34 = scalar_select %p31, %s33, %s17
    %p35 = scmp.ge.s32.totalorder %s34, 2
    %s36 = scalar_select %p35, 0, %s34
    %s37 = ssub.s32 %s17, %s36
    %s38 = ssub.s32 %s18, %s32
    %s39 = sor.u32 %s37, %s38
    %p40 = scmp.eq.s32.totalorder %s39, 0
    %s42 = sadd.s32 %s41, 1
    %s43 = scalar_select %p40, %s41, %s42
    %p46 = pneg %p40
    %p47 = scmp.eq.s32.totalorder %s10, 1
    %p48 = por %p46, %p47
    %p49 = scmp.ne.s32.totalorder %s41, %s44
    %p50 = scmp.eq.s32.totalorder %s10, 0
    %p51 = por %p49, %p50
    %p52 = scmp.ne.s32.totalorder %s41, %s44
    %p53 = scmp.eq.s32.totalorder %s15, 1
    %p54 = por %p52, %p53
    %p55 = scmp.ne.s32.totalorder %s44, %s45
    %p56 = scmp.eq.s32.totalorder %s15, 0
    %p57 = por %p55, %p56
    %p58 = scmp.ne.s32.totalorder %s44, %s45
    %p59 = scmp.eq.s32.totalorder %s16, 1
    %p60 = por %p58, %p59
    %p62 = scmp.ne.s32.totalorder %s45, %s61
    %p63 = scmp.eq.s32.totalorder %s16, 0
    %p64 = por %p62, %p63
    %s65 = ssub.s32 %s19, %s28
    %p66 = scmp.eq.s32.totalorder %s65, 0
    %s68 = sadd.s32 %s67, 1
    %s69 = scalar_select %p66, %s67, %s68
    %p72 = pneg %p66
    %p73 = scmp.eq.s32.totalorder %s10, 1
    %p74 = por %p72, %p73
    %p75 = scmp.ne.s32.totalorder %s67, %s70
    %p76 = scmp.eq.s32.totalorder %s10, 0
    %p77 = por %p75, %p76
    %p78 = scmp.ne.s32.totalorder %s67, %s70
    %p79 = scmp.eq.s32.totalorder %s15, 1
    %p80 = por %p78, %p79
    %p81 = scmp.ne.s32.totalorder %s70, %s71
    %p82 = scmp.eq.s32.totalorder %s15, 0
    %p83 = por %p81, %p82
    %p84 = scmp.ne.s32.totalorder %s70, %s71
    %p85 = scmp.eq.s32.totalorder %s16, 1
    %p86 = por %p84, %p85
    %p88 = scmp.ne.s32.totalorder %s71, %s87
    %p89 = scmp.eq.s32.totalorder %s16, 0
    %p90 = por %p88, %p89
    %s91 = ssub.s32 %s19, %s28
    %p92 = scmp.eq.s32.totalorder %s91, 0
    %s94 = sadd.s32 %s93, 1
    %s95 = scalar_select %p92, %s93, %s94
    %p98 = pneg %p92
    %p99 = scmp.eq.s32.totalorder %s10, 1
    %p100 = por %p98, %p99
    %p101 = scmp.ne.s32.totalorder %s93, %s96
    %p102 = scmp.eq.s32.totalorder %s10, 0
    %p103 = por %p101, %p102
    %p104 = scmp.ne.s32.totalorder %s93, %s96
    %p105 = scmp.eq.s32.totalorder %s15, 1
    %p106 = por %p104, %p105
    %p107 = scmp.ne.s32.totalorder %s96, %s97
    %p108 = scmp.eq.s32.totalorder %s15, 0
    %p109 = por %p107, %p108
    %p110 = scmp.ne.s32.totalorder %s96, %s97
    %p111 = scmp.eq.s32.totalorder %s16, 1
    %p112 = por %p110, %p111
    %p114 = scmp.ne.s32.totalorder %s97, %s113
    %p115 = scmp.eq.s32.totalorder %s16, 0
    %p116 = por %p114, %p115
    %s117 = ssub.s32 %s19, %s28
    %p118 = scmp.eq.s32.totalorder %s117, 0
    %s120 = sadd.s32 %s119, 1
    %s121 = scalar_select %p118, %s119, %s120
    %p124 = pneg %p118
    %p125 = scmp.eq.s32.totalorder %s10, 1
    %p126 = por %p124, %p125
    %p127 = scmp.ne.s32.totalorder %s119, %s122
    %p128 = scmp.eq.s32.totalorder %s10, 0
    %p129 = por %p127, %p128
    %p130 = scmp.ne.s32.totalorder %s119, %s122
    %p131 = scmp.eq.s32.totalorder %s15, 1
    %p132 = por %p130, %p131
    %p133 = scmp.ne.s32.totalorder %s122, %s123
    %p134 = scmp.eq.s32.totalorder %s15, 0
    %p135 = por %p133, %p134
    %p136 = scmp.ne.s32.totalorder %s122, %s123
    %p137 = scmp.eq.s32.totalorder %s16, 1
    %p138 = por %p136, %p137
    %p140 = scmp.ne.s32.totalorder %s123, %s139
    %p141 = scmp.eq.s32.totalorder %s16, 0
    %p142 = por %p140, %p141
    %s143 = ssub.s32 %s17, %s36
    %s144 = ssub.s32 %s18, %s32
    %s145 = sor.u32 %s143, %s144
    %s146 = ssub.s32 %s19, %s28
    %s147 = sor.u32 %s145, %s146
    %p148 = scmp.eq.s32.totalorder %s147, 0
    %s150 = sadd.s32 %s149, 1
    %s151 = scalar_select %p148, %s149, %s150
    %p154 = pneg %p148
    %p155 = scmp.eq.s32.totalorder %s10, 1
    %p156 = por %p154, %p155
    %p157 = scmp.ne.s32.totalorder %s149, %s152
    %p158 = scmp.eq.s32.totalorder %s10, 0
    %p159 = por %p157, %p158
    %p160 = scmp.ne.s32.totalorder %s149, %s152
    %p161 = scmp.eq.s32.totalorder %s15, 1
    %p162 = por %p160, %p161
    %p163 = scmp.ne.s32.totalorder %s152, %s153
    %p164 = scmp.eq.s32.totalorder %s15, 0
    %p165 = por %p163, %p164
    %p166 = scmp.ne.s32.totalorder %s152, %s153
    %p167 = scmp.eq.s32.totalorder %s16, 1
    %p168 = por %p166, %p167
    %p170 = scmp.ne.s32.totalorder %s153, %s169
    %p171 = scmp.eq.s32.totalorder %s16, 0
    %p172 = por %p170, %p171
    %p173 = scmp.le.s32.totalorder 1, %s10
    %p174 = scmp.lt.s32.totalorder %s10, 3
    %p175 = pnand %p173, %p174
    %p176 = pneg %p175
    // Predicated region
    $region9: #{conv_norm_act_aa.1} parent=5 // pred_check
      _
    $region10: #{conv_norm_act_aa.1} parent=5 // pred_check_branch
      %178 = sbr.rel (%p175) target = $region12
    $region11: #{conv_norm_act_aa.1} parent=5 // pred_region
      %s179 = ssub.s32 %s10, 1
      // Predicated region
      $region13: #{conv_norm_act_aa.1} parent=11 // pred_check
        %p180 = pneg %p83
      $region14: #{conv_norm_act_aa.1} parent=11 // pred_check_branch
        %182 = sbr.rel (%p180) target = $region16
      $region15: #{conv_norm_act_aa.1} parent=11 // pred_region
        %p183 = scmp.lt.s32.totalorder %s22, 0
        %s184 = scalar_select %p183, %s22, 0
        %s185 = smul.addr %s184, 4
        %s186 = scalar_lea.vmem %s1, %s185
      $region16: #{conv_norm_act_aa.1} parent=11 // pred_fallthru
        _
      // Predicated region
      $region17: #{conv_norm_act_aa.1} parent=11 // pred_check
        %p187 = pneg %p109
      $region18: #{conv_norm_act_aa.1} parent=11 // pred_check_branch
        %189 = sbr.rel (%p187) target = $region20
      $region19: #{conv_norm_act_aa.1} parent=11 // pred_region
        %p190 = scmp.lt.s32.totalorder %s22, 0
        %s191 = scalar_select %p190, %s22, 0
        %s192 = scalar_lea.vmem %s2, %s191
      $region20: #{conv_norm_act_aa.1} parent=11 // pred_fallthru
        _
      // Predicated region
      $region21: #{conv_norm_act_aa.1} parent=11 // pred_check
        %p193 = pneg %p135
      $region22: #{conv_norm_act_aa.1} parent=11 // pred_check_branch
        %195 = sbr.rel (%p193) target = $region24
      $region23: #{conv_norm_act_aa.1} parent=11 // pred_region
        %p196 = scmp.lt.s32.totalorder %s22, 0
        %s197 = scalar_select %p196, %s22, 0
        %s198 = scalar_lea.vmem %s3, %s197
      $region24: #{conv_norm_act_aa.1} parent=11 // pred_fallthru
        _
    $region12: #{conv_norm_act_aa.1} parent=5 // pred_fallthru
      _
    %p199 = scmp.lt.s32.totalorder %s10, 2
    // Predicated region
    $region25: #{conv_norm_act_aa.1} parent=5 // pred_check
      %p200 = pneg %p199
    $region26: #{conv_norm_act_aa.1} parent=5 // pred_check_branch
      %202 = sbr.rel (%p200) target = $region28
    $region27: #{conv_norm_act_aa.1} parent=5 // pred_region
      // Predicated region
      $region29: #{conv_norm_act_aa.1} parent=27 // pred_check
        %p203 = pneg %p51
      $region30: #{conv_norm_act_aa.1} parent=27 // pred_check_branch
        %205 = sbr.rel (%p203) target = $region32
      $region31: #{conv_norm_act_aa.1} parent=27 // pred_region
        %s206 = smul.u32 16, %s18
        %p207 = scmp.lt.s32.totalorder %s17, 1
        %s208 = scalar_select %p207, %s17, 1
        %p209 = scmp.lt.s32.totalorder %s206, 15
        %s210 = scalar_select %p209, %s206, 15
        %s211 = smul.addr %s210, 2
        %s212 = smul.addr %s208, 32
        %s213 = sadd.s32 %s211, %s212
        %s214 = smul.addr %s213, 4
        %s215 = scalar_lea.vmem %s0, %s214
        %s216 = smul.u32 16, %s18
      $region32: #{conv_norm_act_aa.1} parent=27 // pred_fallthru
        _
    $region28: #{conv_norm_act_aa.1} parent=5 // pred_fallthru
      _
    %p217 = scmp.le.s32.totalorder 1, %s10
    %p218 = scmp.lt.s32.totalorder %s10, 3
    %p219 = pnand %p217, %p218
    %p220 = pneg %p219
    // Predicated region
    $region33: #{conv_norm_act_aa.1} parent=5 // pred_check
      _
    $region34: #{conv_norm_act_aa.1} parent=5 // pred_check_branch
      %222 = sbr.rel (%p219) target = $region36
    $region35: #{conv_norm_act_aa.1} parent=5 // pred_region
      %s223 = ssub.s32 %s10, 1
      %s224 = smul.u32 16, %s21
      %p225 = scmp.lt.s32.totalorder %s20, 1
      %s226 = scalar_select %p225, %s20, 1
      %p227 = scmp.lt.s32.totalorder %s224, 15
      %s228 = scalar_select %p227, %s224, 15
      %s229 = smul.addr %s228, 2
      %s230 = smul.addr %s226, 32
      %s231 = sadd.s32 %s229, %s230
      %s232 = smul.addr %s231, 4
      %s233 = scalar_lea.vmem %s0, %s232
      %p234 = pneg %p57
      %p235 = pneg %p54
      %p236 = scmp.lt.s32.totalorder %s22, 0
      %s237 = scalar_select %p236, %s22, 0
      %s238 = smul.addr %s237, 4
      %s239 = scalar_lea.vmem %s1, %s238
      %p240 = pneg %p83
      %p241 = pneg %p80
      %p242 = scmp.lt.s32.totalorder %s22, 0
      %s243 = scalar_select %p242, %s22, 0
      %s244 = scalar_lea.vmem %s2, %s243
      %p245 = pneg %p109
      %p246 = pneg %p106
      %p247 = scmp.lt.s32.totalorder %s22, 0
      %s248 = scalar_select %p247, %s22, 0
      %s249 = scalar_lea.vmem %s3, %s248
      %p250 = pneg %p135
      %p251 = pneg %p132
      %p252 = pneg %p165
      %p253 = pneg %p162
      %s254 = smul.u32 16, %s21
      %p255 = scmp.lt.s32.totalorder %s20, 1
      %s256 = scalar_select %p255, %s20, 1
      %p257 = scmp.lt.s32.totalorder %s254, 15
      %s258 = scalar_select %p257, %s254, 15
      %p259 = scmp.lt.s32.totalorder %s22, 0
      %s260 = scalar_select %p259, %s22, 0
      %s261 = smul.addr %s258, 2
      %s262 = sadd.s32 %s260, %s261
      %s263 = smul.addr %s256, 32
      %s264 = sadd.s32 %s262, %s263
      %s265 = smul.addr %s264, 8
      %s266 = scalar_lea.vmem %s4, %s265
      %s267 = smul.u32 16, %s21
      %p268 = scmp.lt.s32.totalorder %s20, 1
      %s269 = scalar_select %p268, %s20, 1
      %p270 = scmp.lt.s32.totalorder %s267, 15
      %s271 = scalar_select %p270, %s267, 15
      %s272 = smul.addr %s271, 2
      %s273 = smul.addr %s269, 32
      %s274 = sadd.s32 %s272, %s273
      %s275 = smul.addr %s274, 4
      %s276 = scalar_lea.vmem %s0, %s275
      %s277 = smul.u32 16, %s21
      %p278 = scmp.lt.s32.totalorder %s22, 0
      %s279 = scalar_select %p278, %s22, 0
      %s280 = smul.addr %s279, 4
      %s281 = scalar_lea.vmem %s1, %s280
      %p282 = scmp.lt.s32.totalorder %s22, 0
      %s283 = scalar_select %p282, %s22, 0
      %s284 = scalar_lea.vmem %s2, %s283
      %p285 = scmp.lt.s32.totalorder %s22, 0
      %s286 = scalar_select %p285, %s22, 0
      %s287 = scalar_lea.vmem %s3, %s286
      %s288 = smul.u32 16, %s21
      %p289 = scmp.lt.s32.totalorder %s20, 1
      %s290 = scalar_select %p289, %s20, 1
      %p291 = scmp.lt.s32.totalorder %s288, 15
      %s292 = scalar_select %p291, %s288, 15
      %p293 = scmp.lt.s32.totalorder %s22, 0
      %s294 = scalar_select %p293, %s22, 0
      %s295 = smul.addr %s292, 2
      %s296 = sadd.s32 %s294, %s295
      %s297 = smul.addr %s290, 32
      %s298 = sadd.s32 %s296, %s297
      %s299 = smul.addr %s298, 8
      %s300 = scalar_lea.vmem %s4, %s299
      %s301 = smul.u32 16, %s21
      %v303 = vld [vmem:[%s276] sm:$0xf]
      %v304 = vld [vmem:[%s276 + $0x4] sm:$0xf]
      %v305 = vld [vmem:[%s276 + $0x8] sm:$0xf]
      %v306 = vld [vmem:[%s276 + $0xc] sm:$0xf]
      %v307 = vld [vmem:[%s276 + $0x10] sm:$0xf]
      %v308 = vld [vmem:[%s276 + $0x14] sm:$0xf]
      %v309 = vld [vmem:[%s276 + $0x18] sm:$0xf]
      %v310 = vld [vmem:[%s276 + $0x1c] sm:$0xf]
      %v311 = vld [vmem:[%s276 + $0x20] sm:$0xf]
      %v312 = vld [vmem:[%s276 + $0x24] sm:$0xf]
      %v313 = vld [vmem:[%s276 + $0x28] sm:$0xf]
      %v314 = vld [vmem:[%s276 + $0x2c] sm:$0xf]
      %v315 = vld [vmem:[%s276 + $0x30] sm:$0xf]
      %v316 = vld [vmem:[%s276 + $0x34] sm:$0xf]
      %v317 = vld [vmem:[%s276 + $0x38] sm:$0xf]
      %v318 = vld [vmem:[%s276 + $0x3c] sm:$0xf]
      %v319 = vld [vmem:[%s276 + $0x40] sm:$0xf]
      %v320 = vld [vmem:[%s276 + $0x44] sm:$0xf]
      %v321 = vld [vmem:[%s276 + $0x48] sm:$0xf]
      %v322 = vld [vmem:[%s276 + $0x4c] sm:$0xf]
      %v323 = vld [vmem:[%s276 + $0x50] sm:$0xf]
      %v324 = vld [vmem:[%s276 + $0x54] sm:$0xf]
      %v325 = vld [vmem:[%s276 + $0x58] sm:$0xf]
      %v326 = vld [vmem:[%s276 + $0x5c] sm:$0xf]
      %v327 = vld [vmem:[%s276 + $0x60] sm:$0xf]
      %v328 = vld [vmem:[%s276 + $0x64] sm:$0xf]
      %v329 = vld [vmem:[%s276 + $0x68] sm:$0xf]
      %v330 = vld [vmem:[%s276 + $0x6c] sm:$0xf]
      %v331 = vld [vmem:[%s276 + $0x70] sm:$0xf]
      %v332 = vld [vmem:[%s276 + $0x74] sm:$0xf]
      %v333 = vld [vmem:[%s276 + $0x78] sm:$0xf]
      %v334 = vld [vmem:[%s276 + $0x7c] sm:$0xf]
      %v335 = vld [vmem:[%s281] sm:$0xf]
      %v336 = vld [vmem:[%s281 + $0x4] sm:$0xf]
      %v337 = vld [vmem:[%s281 + $0x8] sm:$0xf]
      %v338 = vld [vmem:[%s281 + $0xc] sm:$0xf]
      %v339 = vld [vmem:[%s281 + $0x10] sm:$0x3]
      %v372 = vunpack.c.l.b16 %v303
      %v373 = vunpack.c.l.b16 %v304
      %v374 = vunpack.c.l.b16 %v305
      %v375 = vunpack.c.l.b16 %v306
      %v376 = vunpack.c.l.b16 %v307
      %v377 = vunpack.c.l.b16 %v308
      %v378 = vunpack.c.l.b16 %v309
      %v379 = vunpack.c.l.b16 %v310
      %v380 = vunpack.c.l.b16 %v311
      %v381 = vunpack.c.l.b16 %v312
      %v382 = vunpack.c.l.b16 %v313
      %v383 = vunpack.c.l.b16 %v314
      %v384 = vunpack.c.l.b16 %v315
      %v385 = vunpack.c.l.b16 %v316
      %v386 = vunpack.c.l.b16 %v317
      %v387 = vunpack.c.l.b16 %v318
      %v388 = vunpack.c.l.b16 %v319
      %v389 = vunpack.c.l.b16 %v320
      %v390 = vunpack.c.l.b16 %v321
      %v391 = vunpack.c.l.b16 %v322
      %v392 = vunpack.c.l.b16 %v323
      %v393 = vunpack.c.l.b16 %v324
      %v394 = vunpack.c.l.b16 %v325
      %v395 = vunpack.c.l.b16 %v326
      %v396 = vunpack.c.l.b16 %v327
      %v397 = vunpack.c.l.b16 %v328
      %v398 = vunpack.c.l.b16 %v329
      %v399 = vunpack.c.l.b16 %v330
      %v400 = vunpack.c.l.b16 %v331
      %v401 = vunpack.c.l.b16 %v332
      %v402 = vunpack.c.l.b16 %v333
      %v403 = vunpack.c.l.b16 %v334
      %v404 = vpack.c.b16 %v373, %v372
      %v405 = vpack.c.b16 %v375, %v374
      %v406 = vpack.c.b16 %v377, %v376
      %v407 = vpack.c.b16 %v379, %v378
      %v408 = vpack.c.b16 %v381, %v380
      %v409 = vpack.c.b16 %v383, %v382
      %v410 = vpack.c.b16 %v385, %v384
      %v411 = vpack.c.b16 %v387, %v386
      %v412 = vpack.c.b16 %v389, %v388
      %v413 = vpack.c.b16 %v391, %v390
      %v414 = vpack.c.b16 %v393, %v392
      %v415 = vpack.c.b16 %v395, %v394
      %v416 = vpack.c.b16 %v397, %v396
      %v417 = vpack.c.b16 %v399, %v398
      %v418 = vpack.c.b16 %v401, %v400
      %v419 = vpack.c.b16 %v403, %v402
      %v425 = vunpack.c.l.b16 %v335
      %v426 = vunpack.c.l.b16 %v336
      %v427 = vunpack.c.l.b16 %v337
      %v428 = vunpack.c.l.b16 %v338
      %v429 = vunpack.c.l.b16 %v339
      %v430 = vpack.c.b16 %v426, %v425
      %v431 = vpack.c.b16 %v428, %v427
      %v432 = vpack.c.b16 %v429, %v429
      %vm435 = vcmask 293888
      %v437 = vsel %vm435, %v404, 0
      %v440 = vsel %vm435, %v405, 0
      %v443 = vsel %vm435, %v406, 0
      %v446 = vsel %vm435, %v407, 0
      %v449 = vsel %vm435, %v408, 0
      %v452 = vsel %vm435, %v409, 0
      %v455 = vsel %vm435, %v410, 0
      %v458 = vsel %vm435, %v411, 0
      %v461 = vsel %vm435, %v412, 0
      %v464 = vsel %vm435, %v413, 0
      %v467 = vsel %vm435, %v414, 0
      %v470 = vsel %vm435, %v415, 0
      %v473 = vsel %vm435, %v416, 0
      %v476 = vsel %vm435, %v417, 0
      %v479 = vsel %vm435, %v418, 0
      %v482 = vsel %vm435, %v419, 0
      %vm484 = vcmask 1041408
      %v486 = vsel %vm484, %v432, 0
      %488 = vmatprep.subr.bf16.mxu0 0
      %489 = vmatpush1.bf16.msra.mxu0 %v430
      %490 = vmatprep.subr.bf16.mxu0 0
      %491 = vmatpush1.bf16.msra.mxu0 %v431
      %492 = vmatprep.subr.bf16.mxu0 0
      %493 = vmatpush1.bf16.msra.mxu0 %v486
      %494 = vmatprep.subr.bf16.mxu0 0
      %495 = vmatpush1.bf16.msra.mxu0 0
      %496 = vmatprep.subr.bf16.mxu0 0
      %497 = vmatpush1.bf16.msra.mxu0 0
      %498 = vmatprep.subr.bf16.mxu0 0
      %499 = vmatpush1.bf16.msra.mxu0 0
      %500 = vmatprep.subr.bf16.mxu0 0
      %501 = vmatpush1.bf16.msra.mxu0 0
      %502 = vmatprep.subr.bf16.mxu0 0
      %503 = vmatpush1.bf16.msra.mxu0 0
      %504 = vmatprep.subr.bf16.mxu0 0
      %505 = vmatpush1.bf16.msra.mxu0 0
      %506 = vmatprep.subr.bf16.mxu0 0
      %507 = vmatpush1.bf16.msra.mxu0 0
      %508 = vmatprep.subr.bf16.mxu0 0
      %509 = vmatpush1.bf16.msra.mxu0 0
      %510 = vmatprep.subr.bf16.mxu0 0
      %511 = vmatpush1.bf16.msra.mxu0 0
      %512 = vmatprep.subr.bf16.mxu0 0
      %513 = vmatpush1.bf16.msra.mxu0 0
      %514 = vmatprep.subr.bf16.mxu0 0
      %515 = vmatpush1.bf16.msra.mxu0 0
      %516 = vmatprep.subr.bf16.mxu0 0
      %517 = vmatpush1.bf16.msra.mxu0 0
      %518 = vmatprep.subr.bf16.mxu0 0
      %519 = vmatpush1.bf16.msra.mxu0 0
      %520 = vmatprep.mubr.bf16.mxu0 0
      %521 = vmatmul.mubr.bf16.gmra.mrb[0].mxu0 %v437
      %v522 = vpop.f32.mrb[0].mxu0
      %v523 = vadd.f32 0.0, %v522
      %v524 = vpop.f32.mrb[0].mxu0
      %v525 = vpop.f32.mrb[0].mxu0
      %v526 = vadd.f32 0.0, %v525
      %v527 = vpop.f32.mrb[0].mxu0
      %528 = vmatprep.mubr.bf16.mxu0 0
      %529 = vmatmul.mubr.bf16.gmra.mrb[0].mxu0 %v440
      %v530 = vpop.f32.mrb[0].mxu0
      %v531 = vadd.f32 0.0, %v530
      %v532 = vpop.f32.mrb[0].mxu0
      %v533 = vpop.f32.mrb[0].mxu0
      %v534 = vadd.f32 0.0, %v533
      %v535 = vpop.f32.mrb[0].mxu0
      %536 = vmatprep.mubr.bf16.mxu0 0
      %537 = vmatmul.mubr.bf16.gmra.mrb[0].mxu0 %v443
      %v538 = vpop.f32.mrb[0].mxu0
      %v539 = vadd.f32 0.0, %v538
      %v540 = vpop.f32.mrb[0].mxu0
      %v541 = vpop.f32.mrb[0].mxu0
      %v542 = vadd.f32 0.0, %v541
      %v543 = vpop.f32.mrb[0].mxu0
      %544 = vmatprep.mubr.bf16.mxu0 0
      %545 = vmatmul.mubr.bf16.gmra.mrb[0].mxu0 %v446
      %v546 = vpop.f32.mrb[0].mxu0
      %v547 = vadd.f32 0.0, %v546
      %v548 = vpop.f32.mrb[0].mxu0
      %v549 = vpop.f32.mrb[0].mxu0
      %v550 = vadd.f32 0.0, %v549
      %v551 = vpop.f32.mrb[0].mxu0
      %552 = vmatprep.mubr.bf16.mxu0 0
      %553 = vmatmul.mubr.bf16.gmra.mrb[0].mxu0 %v449
      %v554 = vpop.f32.mrb[0].mxu0
      %v555 = vadd.f32 0.0, %v554
      %v556 = vpop.f32.mrb[0].mxu0
      %v557 = vpop.f32.mrb[0].mxu0
      %v558 = vadd.f32 0.0, %v557
      %v559 = vpop.f32.mrb[0].mxu0
      %560 = vmatprep.mubr.bf16.mxu0 0
      %561 = vmatmul.mubr.bf16.gmra.mrb[0].mxu0 %v452
      %v562 = vpop.f32.mrb[0].mxu0
      %v563 = vadd.f32 0.0, %v562
      %v564 = vpop.f32.mrb[0].mxu0
      %v565 = vpop.f32.mrb[0].mxu0
      %v566 = vadd.f32 0.0, %v565
      %v567 = vpop.f32.mrb[0].mxu0
      %568 = vmatprep.mubr.bf16.mxu0 0
      %569 = vmatmul.mubr.bf16.gmra.mrb[0].mxu0 %v455
      %v570 = vpop.f32.mrb[0].mxu0
      %v571 = vadd.f32 0.0, %v570
      %v572 = vpop.f32.mrb[0].mxu0
      %v573 = vpop.f32.mrb[0].mxu0
      %v574 = vadd.f32 0.0, %v573
      %v575 = vpop.f32.mrb[0].mxu0
      %576 = vmatprep.mubr.bf16.mxu0 0
      %577 = vmatmul.mubr.bf16.gmra.mrb[0].mxu0 %v458
      %v578 = vpop.f32.mrb[0].mxu0
      %v579 = vadd.f32 0.0, %v578
      %v580 = vpop.f32.mrb[0].mxu0
      %v581 = vpop.f32.mrb[0].mxu0
      %v582 = vadd.f32 0.0, %v581
      %v583 = vpop.f32.mrb[0].mxu0
      %584 = vmatprep.mubr.bf16.mxu0 0
      %585 = vmatmul.mubr.bf16.gmra.mrb[0].mxu0 %v461
      %v586 = vpop.f32.mrb[0].mxu0
      %v587 = vadd.f32 0.0, %v586
      %v588 = vpop.f32.mrb[0].mxu0
      %v589 = vpop.f32.mrb[0].mxu0
      %v590 = vadd.f32 0.0, %v589
      %v591 = vpop.f32.mrb[0].mxu0
      %592 = vmatprep.mubr.bf16.mxu0 0
      %593 = vmatmul.mubr.bf16.gmra.mrb[0].mxu0 %v464
      %v594 = vpop.f32.mrb[0].mxu0
      %v595 = vadd.f32 0.0, %v594
      %v596 = vpop.f32.mrb[0].mxu0
      %v597 = vpop.f32.mrb[0].mxu0
      %v598 = vadd.f32 0.0, %v597
      %v599 = vpop.f32.mrb[0].mxu0
      %600 = vmatprep.mubr.bf16.mxu0 0
      %601 = vmatmul.mubr.bf16.gmra.mrb[0].mxu0 %v467
      %v602 = vpop.f32.mrb[0].mxu0
      %v603 = vadd.f32 0.0, %v602
      %v604 = vpop.f32.mrb[0].mxu0
      %v605 = vpop.f32.mrb[0].mxu0
      %v606 = vadd.f32 0.0, %v605
      %v607 = vpop.f32.mrb[0].mxu0
      %608 = vmatprep.mubr.bf16.mxu0 0
      %609 = vmatmul.mubr.bf16.gmra.mrb[0].mxu0 %v470
      %v610 = vpop.f32.mrb[0].mxu0
      %v611 = vadd.f32 0.0, %v610
      %v612 = vpop.f32.mrb[0].mxu0
      %v613 = vpop.f32.mrb[0].mxu0
      %v614 = vadd.f32 0.0, %v613
      %v615 = vpop.f32.mrb[0].mxu0
      %616 = vmatprep.mubr.bf16.mxu0 0
      %617 = vmatmul.mubr.bf16.gmra.mrb[0].mxu0 %v473
      %v618 = vpop.f32.mrb[0].mxu0
      %v619 = vadd.f32 0.0, %v618
      %v620 = vpop.f32.mrb[0].mxu0
      %v621 = vpop.f32.mrb[0].mxu0
      %v622 = vadd.f32 0.0, %v621
      %v623 = vpop.f32.mrb[0].mxu0
      %624 = vmatprep.mubr.bf16.mxu0 0
      %625 = vmatmul.mubr.bf16.gmra.mrb[0].mxu0 %v476
      %v626 = vpop.f32.mrb[0].mxu0
      %v627 = vadd.f32 0.0, %v626
      %v628 = vpop.f32.mrb[0].mxu0
      %v629 = vpop.f32.mrb[0].mxu0
      %v630 = vadd.f32 0.0, %v629
      %v631 = vpop.f32.mrb[0].mxu0
      %632 = vmatprep.mubr.bf16.mxu0 0
      %633 = vmatmul.mubr.bf16.gmra.mrb[0].mxu0 %v479
      %v634 = vpop.f32.mrb[0].mxu0
      %v635 = vadd.f32 0.0, %v634
      %v636 = vpop.f32.mrb[0].mxu0
      %v637 = vpop.f32.mrb[0].mxu0
      %v638 = vadd.f32 0.0, %v637
      %v639 = vpop.f32.mrb[0].mxu0
      %640 = vmatprep.mubr.bf16.mxu0 0
      %641 = vmatmul.mubr.bf16.gmra.mrb[0].mxu0 %v482
      %v642 = vpop.f32.mrb[0].mxu0
      %v643 = vadd.f32 0.0, %v642
      %v644 = vpop.f32.mrb[0].mxu0
      %v645 = vpop.f32.mrb[0].mxu0
      %v646 = vadd.f32 0.0, %v645
      %v647 = vpop.f32.mrb[0].mxu0
      %648 = vdwg.mxu0
      %v649 = vld [vmem:[%s284] sm:$0x1]
      %v651 = vlaneseq
      %v652 = vshrl.u32 %v651, 7
      %v653 = vsub.s32 0, %v652
      %v654 = vrot.slane %v649, %v653
      %v656 = vmul.f32 %v523, %v654
      %v657 = vmul.f32 %v526, %v654
      %v658 = vmul.f32 %v531, %v654
      %v659 = vmul.f32 %v534, %v654
      %v660 = vmul.f32 %v539, %v654
      %v661 = vmul.f32 %v542, %v654
      %v662 = vmul.f32 %v547, %v654
      %v663 = vmul.f32 %v550, %v654
      %v664 = vmul.f32 %v555, %v654
      %v665 = vmul.f32 %v558, %v654
      %v666 = vmul.f32 %v563, %v654
      %v667 = vmul.f32 %v566, %v654
      %v668 = vmul.f32 %v571, %v654
      %v669 = vmul.f32 %v574, %v654
      %v670 = vmul.f32 %v579, %v654
      %v671 = vmul.f32 %v582, %v654
      %v672 = vmul.f32 %v587, %v654
      %v673 = vmul.f32 %v590, %v654
      %v674 = vmul.f32 %v595, %v654
      %v675 = vmul.f32 %v598, %v654
      %v676 = vmul.f32 %v603, %v654
      %v677 = vmul.f32 %v606, %v654
      %v678 = vmul.f32 %v611, %v654
      %v679 = vmul.f32 %v614, %v654
      %v680 = vmul.f32 %v619, %v654
      %v681 = vmul.f32 %v622, %v654
      %v682 = vmul.f32 %v627, %v654
      %v683 = vmul.f32 %v630, %v654
      %v684 = vmul.f32 %v635, %v654
      %v685 = vmul.f32 %v638, %v654
      %v686 = vmul.f32 %v643, %v654
      %v687 = vmul.f32 %v646, %v654
      %v688 = vld [vmem:[%s287] sm:$0x1]
      %v690 = vlaneseq
      %v691 = vshrl.u32 %v690, 7
      %v692 = vsub.s32 0, %v691
      %v693 = vrot.slane %v688, %v692
      %v695 = vadd.f32 %v656, %v693
      %v696 = vadd.f32 %v657, %v693
      %v697 = vadd.f32 %v658, %v693
      %v698 = vadd.f32 %v659, %v693
      %v699 = vadd.f32 %v660, %v693
      %v700 = vadd.f32 %v661, %v693
      %v701 = vadd.f32 %v662, %v693
      %v702 = vadd.f32 %v663, %v693
      %v703 = vadd.f32 %v664, %v693
      %v704 = vadd.f32 %v665, %v693
      %v705 = vadd.f32 %v666, %v693
      %v706 = vadd.f32 %v667, %v693
      %v707 = vadd.f32 %v668, %v693
      %v708 = vadd.f32 %v669, %v693
      %v709 = vadd.f32 %v670, %v693
      %v710 = vadd.f32 %v671, %v693
      %v711 = vadd.f32 %v672, %v693
      %v712 = vadd.f32 %v673, %v693
      %v713 = vadd.f32 %v674, %v693
      %v714 = vadd.f32 %v675, %v693
      %v715 = vadd.f32 %v676, %v693
      %v716 = vadd.f32 %v677, %v693
      %v717 = vadd.f32 %v678, %v693
      %v718 = vadd.f32 %v679, %v693
      %v719 = vadd.f32 %v680, %v693
      %v720 = vadd.f32 %v681, %v693
      %v721 = vadd.f32 %v682, %v693
      %v722 = vadd.f32 %v683, %v693
      %v723 = vadd.f32 %v684, %v693
      %v724 = vadd.f32 %v685, %v693
      %v725 = vadd.f32 %v686, %v693
      %v726 = vadd.f32 %v687, %v693
      %v727 = vmax.f32 %v695, 0.0
      %v728 = vmax.f32 %v696, 0.0
      %v729 = vmax.f32 %v697, 0.0
      %v730 = vmax.f32 %v698, 0.0
      %v731 = vmax.f32 %v699, 0.0
      %v732 = vmax.f32 %v700, 0.0
      %v733 = vmax.f32 %v701, 0.0
      %v734 = vmax.f32 %v702, 0.0
      %v735 = vmax.f32 %v703, 0.0
      %v736 = vmax.f32 %v704, 0.0
      %v737 = vmax.f32 %v705, 0.0
      %v738 = vmax.f32 %v706, 0.0
      %v739 = vmax.f32 %v707, 0.0
      %v740 = vmax.f32 %v708, 0.0
      %v741 = vmax.f32 %v709, 0.0
      %v742 = vmax.f32 %v710, 0.0
      %v743 = vmax.f32 %v711, 0.0
      %v744 = vmax.f32 %v712, 0.0
      %v745 = vmax.f32 %v713, 0.0
      %v746 = vmax.f32 %v714, 0.0
      %v747 = vmax.f32 %v715, 0.0
      %v748 = vmax.f32 %v716, 0.0
      %v749 = vmax.f32 %v717, 0.0
      %v750 = vmax.f32 %v718, 0.0
      %v751 = vmax.f32 %v719, 0.0
      %v752 = vmax.f32 %v720, 0.0
      %v753 = vmax.f32 %v721, 0.0
      %v754 = vmax.f32 %v722, 0.0
      %v755 = vmax.f32 %v723, 0.0
      %v756 = vmax.f32 %v724, 0.0
      %v757 = vmax.f32 %v725, 0.0
      %v758 = vmax.f32 %v726, 0.0
      %759 = vst [vmem:[%s300] sm:$0xff] %v727
      %760 = vst [vmem:[%s300 + $0x8] sm:$0xff] %v728
      %761 = vst [vmem:[%s300 + $0x10] sm:$0xff] %v729
      %762 = vst [vmem:[%s300 + $0x18] sm:$0xff] %v730
      %763 = vst [vmem:[%s300 + $0x20] sm:$0xff] %v731
      %764 = vst [vmem:[%s300 + $0x28] sm:$0xff] %v732
      %765 = vst [vmem:[%s300 + $0x30] sm:$0xff] %v733
      %766 = vst [vmem:[%s300 + $0x38] sm:$0xff] %v734
      %767 = vst [vmem:[%s300 + $0x40] sm:$0xff] %v735
      %768 = vst [vmem:[%s300 + $0x48] sm:$0xff] %v736
      %769 = vst [vmem:[%s300 + $0x50] sm:$0xff] %v737
      %770 = vst [vmem:[%s300 + $0x58] sm:$0xff] %v738
      %771 = vst [vmem:[%s300 + $0x60] sm:$0xff] %v739
      %772 = vst [vmem:[%s300 + $0x68] sm:$0xff] %v740
      %773 = vst [vmem:[%s300 + $0x70] sm:$0xff] %v741
      %774 = vst [vmem:[%s300 + $0x78] sm:$0xff] %v742
      %775 = vst [vmem:[%s300 + $0x80] sm:$0xff] %v743
      %776 = vst [vmem:[%s300 + $0x88] sm:$0xff] %v744
      %777 = vst [vmem:[%s300 + $0x90] sm:$0xff] %v745
      %778 = vst [vmem:[%s300 + $0x98] sm:$0xff] %v746
      %779 = vst [vmem:[%s300 + $0xa0] sm:$0xff] %v747
      %780 = vst [vmem:[%s300 + $0xa8] sm:$0xff] %v748
      %781 = vst [vmem:[%s300 + $0xb0] sm:$0xff] %v749
      %782 = vst [vmem:[%s300 + $0xb8] sm:$0xff] %v750
      %783 = vst [vmem:[%s300 + $0xc0] sm:$0xff] %v751
      %784 = vst [vmem:[%s300 + $0xc8] sm:$0xff] %v752
      %785 = vst [vmem:[%s300 + $0xd0] sm:$0xff] %v753
      %786 = vst [vmem:[%s300 + $0xd8] sm:$0xff] %v754
      %787 = vst [vmem:[%s300 + $0xe0] sm:$0xff] %v755
      %788 = vst [vmem:[%s300 + $0xe8] sm:$0xff] %v756
      %789 = vst [vmem:[%s300 + $0xf0] sm:$0xff] %v757
      %790 = vst [vmem:[%s300 + $0xf8] sm:$0xff] %v758
      %s791 = smul.u32 16, %s21
      %p792 = scmp.lt.s32.totalorder %s20, 1
      %s793 = scalar_select %p792, %s20, 1
      %p794 = scmp.lt.s32.totalorder %s791, 15
      %s795 = scalar_select %p794, %s791, 15
      %p796 = scmp.lt.s32.totalorder %s22, 0
      %s797 = scalar_select %p796, %s22, 0
      %s798 = smul.addr %s795, 2
      %s799 = sadd.s32 %s797, %s798
      %s800 = smul.addr %s793, 32
      %s801 = sadd.s32 %s799, %s800
      %s802 = smul.addr %s801, 8
      %s803 = scalar_lea.vmem %s4, %s802
      // Predicated region
      $region37: #{conv_norm_act_aa.1} parent=35 // pred_check
        %p804 = pneg %p162
      $region38: #{conv_norm_act_aa.1} parent=35 // pred_check_branch
        %806 = sbr.rel (%p804) target = $region40
      $region39: #{conv_norm_act_aa.1} parent=35 // pred_region
        %s807 = smul.u32 16, %s21
      $region40: #{conv_norm_act_aa.1} parent=35 // pred_fallthru
        _
    $region36: #{conv_norm_act_aa.1} parent=5 // pred_fallthru
      _
    %p808 = scmp.le.s32.totalorder 2, %s10
    // Predicated region
    $region41: #{conv_norm_act_aa.1} parent=5 // pred_check
      %p809 = pneg %p808
    $region42: #{conv_norm_act_aa.1} parent=5 // pred_check_branch
      %811 = sbr.rel (%p809) target = $region44
    $region43: #{conv_norm_act_aa.1} parent=5 // pred_region
      %s812 = ssub.s32 %s10, 2
      // Predicated region
      $region45: #{conv_norm_act_aa.1} parent=43 // pred_check
        %p813 = pneg %p168
      $region46: #{conv_norm_act_aa.1} parent=43 // pred_check_branch
        %815 = sbr.rel (%p813) target = $region48
      $region47: #{conv_norm_act_aa.1} parent=43 // pred_region
        %s816 = smul.u32 16, %s24
        %p817 = scmp.lt.s32.totalorder %s23, 1
        %s818 = scalar_select %p817, %s23, 1
        %p819 = scmp.lt.s32.totalorder %s816, 15
        %s820 = scalar_select %p819, %s816, 15
        %p821 = scmp.lt.s32.totalorder %s25, 0
        %s822 = scalar_select %p821, %s25, 0
        %s823 = smul.addr %s820, 2
        %s824 = sadd.s32 %s822, %s823
        %s825 = smul.addr %s818, 32
        %s826 = sadd.s32 %s824, %s825
        %s827 = smul.addr %s826, 8
        %s828 = scalar_lea.vmem %s4, %s827
      $region48: #{conv_norm_act_aa.1} parent=43 // pred_fallthru
        _
    $region44: #{conv_norm_act_aa.1} parent=5 // pred_fallthru
      _
  $region6: #{conv_norm_act_aa.1} parent=0 // loop_footer
    %s14 = sadd.s32 1, %s10
  $region7: #{conv_norm_act_aa.1} parent=0 // loop_footer_branch
    %9 = sbr.rel target = $region3
  $region8: #{conv_norm_act_aa.1} parent=0 // loop_exit
    _

</llo_original>
